<compile_context>
chip_gen: v5e
topology: v5e:2x2
jax: 0.10.0
libtpu: 0.0.40
codegen_flags: <defaults>
</compile_context>

<pallas_src>
import functools
import math

import jax
import jax.numpy as jnp
from jax.experimental import pallas as pl
from jax.experimental.pallas import tpu as pltpu

NUM_CLASSES = 5
NUM_TOTAL_ITER = 50000
_HALF_LOG_2PI = 0.5 * math.log(2.0 * math.pi)
_MAX_TILE_N = 4096   # samples per grid step; ~0.5 MiB/step double-buffered — fits all gens


# ------------------------------------------------------------------
# Fused lgamma(x) + digamma(x), valid/accurate for x >= 1 (holds for
# alpha = evidence + 1 and for the KL-modified alpha_tilde).
#   lgamma(x)  = lgamma(x+6)  - log( x (x+1) ... (x+5) )        (1 log, not 6)
#   digamma(x) = digamma(x+6) - sum_k 1/(x+k)  (pairwise: 3 divides, not 6)
# Shares z = x+6, 1/z, 1/z^2, log(z) between the two series.
# ------------------------------------------------------------------
def _lgamma_digamma(x):
    x1 = x + 1.0
    x2 = x + 2.0
    x3 = x + 3.0
    x4 = x + 4.0
    x5 = x + 5.0
    z = x + 6.0

    p01 = x * x1
    p23 = x2 * x3
    p45 = x4 * x5
    log_shift = jnp.log(p01 * p23 * p45)                       # one EUP log
    dig_shift = (x + x1) / p01 + (x2 + x3) / p23 + (x4 + x5) / p45  # 3 divides

    inv = 1.0 / z
    inv2 = inv * inv
    logz = jnp.log(z)

    lgam = ((z - 0.5) * logz - z + _HALF_LOG_2PI
            + inv * (1.0 / 12.0 + inv2 * (-1.0 / 360.0
                     + inv2 * (1.0 / 1260.0 + inv2 * (-1.0 / 1680.0))))
            - log_shift)
    digam = (logz - 0.5 * inv
             - inv2 * (1.0 / 12.0 - inv2 * (1.0 / 120.0 - inv2 * (1.0 / 252.0)))
             - dig_shift)
    return lgam, digam


# ------------------------------------------------------------------
# Kernel: one lane-tile of samples per grid step (classes on sublanes).
# Writes per-block partial sums; wrapper does the final /N.
# ------------------------------------------------------------------
def _edl_loss_kernel(ann_ref, n_ref, labels_ref, alpha_ref, probs_ref,
                     loss_part_ref, corr_part_ref, *, tile_n, num_classes):
    alpha = alpha_ref[...]                           # (C, T) f32
    probs = probs_ref[...]                           # (C, T) f32
    labels = labels_ref[...]                         # (1, T) i32
    C, T = alpha.shape

    # Valid-sample mask for the zero/one padded tail of the last tile.
    idx = (pl.program_id(0) * tile_n
           + jax.lax.broadcasted_iota(jnp.int32, (1, T), 1))
    valid = (idx < n_ref[0, 0]).astype(jnp.float32)  # (1, T)

    class_ids = jax.lax.broadcasted_iota(jnp.int32, (C, T), 0)
    y = (class_ids == labels).astype(jnp.float32)    # one-hot, classes on sublanes

    # --- EDL sum-of-squares (log-likelihood) term: single merged class reduce ---
    S = jnp.sum(alpha, axis=0, keepdims=True)        # (1, T)
    inv_S = 1.0 / S
    inv_Sp1 = 1.0 / (S + 1.0)
    p_hat = alpha * inv_S
    loglik_el = (y - p_hat) ** 2 + alpha * (S - alpha) * (inv_S * inv_S * inv_Sp1)
    loglik = jnp.sum(loglik_el, axis=0, keepdims=True)            # (1, T)

    # --- annealed KL( Dir(alpha_tilde) || Dir(1,...,1) ) term ---
    alpha_t = y + (1.0 - y) * alpha                  # (C, T)
    S_t = jnp.sum(alpha_t, axis=0, keepdims=True)    # (1, T)
    lg_a, dg_a = _lgamma_digamma(alpha_t)
    lg_S, dg_S = _lgamma_digamma(S_t)
    kl_el = (alpha_t - 1.0) * (dg_a - dg_S) - lg_a   # merged element-wise term
    kl = (lg_S - float(math.lgamma(num_classes))
          + jnp.sum(kl_el, axis=0, keepdims=True))   # (1, T)

    ann = ann_ref[0, 0]                              # min(1, t/T) runtime scalar (SMEM)
    per_sample = (loglik + ann * kl) * valid         # (1, T)
    loss_part_ref[...] = jnp.broadcast_to(jnp.sum(per_sample), (1, 1, 1))

    # --- accuracy: first-max argmax over classes (torch convention) ---
    max_p = jnp.max(probs, axis=0, keepdims=True)
    pred = jnp.min(jnp.where(probs == max_p,
                             class_ids.astype(jnp.float32),
                             float(num_classes)),
                   axis=0, keepdims=True)            # (1, T) f32 (small ints exact)
    correct = (pred == labels.astype(jnp.float32)).astype(jnp.float32) * valid
    corr_part_ref[...] = jnp.broadcast_to(jnp.sum(correct), (1, 1, 1))


def evidential_learning_loss(out, type_labels, iteration=0,
                             num_classes=NUM_CLASSES,
                             num_total_iter=NUM_TOTAL_ITER):
    """JAX/Pallas equivalent of EvidentialLearningLoss.forward."""
    alpha = out['concentration'][0].astype(jnp.float32)            # (N, C)
    probs = out['expected_probability'][0].astype(jnp.float32)     # (N, C)
    labels = type_labels[0][:, 0].astype(jnp.int32)                # (N,)
    N, C = alpha.shape
    assert C == num_classes

    # Annealing coefficient as a runtime scalar (works for traced `iteration`,
    # one compiled kernel for all training steps).
    ann = jnp.minimum(jnp.float32(1.0),
                      jnp.asarray(iteration, jnp.float32)
                      / jnp.float32(num_total_iter)).reshape(1, 1)
    n_valid = jnp.full((1, 1), N, dtype=jnp.int32)

    # Transposed (C, N) layout: classes on sublanes, samples on lanes; pad the
    # sample axis to a multiple of the lane tile (alpha padded with 1.0 keeps the
    # transcendental math finite; padded samples are masked out in-kernel).
    tile_n = min(_MAX_TILE_N, pl.cdiv(N, 128) * 128)
    n_pad = pl.cdiv(N, tile_n) * tile_n
    pad = n_pad - N
    alpha_t = jnp.pad(alpha.T, ((0, 0), (0, pad)), constant_values=1.0)
    probs_t = jnp.pad(probs.T, ((0, 0), (0, pad)))
    labels2d = jnp.pad(labels.reshape(1, N), ((0, 0), (0, pad)), constant_values=-1)
    grid = (n_pad // tile_n,)

    kernel = functools.partial(_edl_loss_kernel, tile_n=tile_n, num_classes=C)
    loss_parts, corr_parts = pl.pallas_call(
        kernel,
        grid=grid,
        out_shape=(jax.ShapeDtypeStruct((grid[0], 1, 1), jnp.float32),
                   jax.ShapeDtypeStruct((grid[0], 1, 1), jnp.float32)),
        in_specs=[
            pl.BlockSpec(memory_space=pltpu.MemorySpace.SMEM),   # ann      (1,1) f32
            pl.BlockSpec(memory_space=pltpu.MemorySpace.SMEM),   # n_valid  (1,1) i32
            pl.BlockSpec((1, tile_n), lambda i: (0, i)),         # labels   (1,Np) i32
            pl.BlockSpec((C, tile_n), lambda i: (0, i)),         # alpha^T  (C,Np) f32
            pl.BlockSpec((C, tile_n), lambda i: (0, i)),         # probs^T  (C,Np) f32
        ],
        out_specs=(pl.BlockSpec((1, 1, 1), lambda i: (i, 0, 0)),
                   pl.BlockSpec((1, 1, 1), lambda i: (i, 0, 0))),
        compiler_params=pltpu.CompilerParams(
            dimension_semantics=("parallel",)),   # v7x: batch tiles split over both TCs
    )(ann, n_valid, labels2d, alpha_t, probs_t)

    inv_n = 1.0 / float(N)
    return {'loss': jnp.sum(loss_parts) * inv_n,
            'accuracy': jnp.sum(corr_parts) * inv_n}


if __name__ == "__main__":
    key = jax.random.PRNGKey(0)
    k1, k2 = jax.random.split(key)

    N, C = 8, NUM_CLASSES                      # small batch of 8 samples, 5 classes
    # Dirichlet concentrations: evidence (>=0) + 1, as produced by the model head.
    evidence = jax.nn.softplus(jax.random.normal(k1, (N, C), dtype=jnp.float32))
    alpha = evidence + 1.0                     # out['concentration'][0]
    probs = alpha / jnp.sum(alpha, axis=1, keepdims=True)  # expected_probability
    labels = jax.random.randint(k2, (N,), 0, C).astype(jnp.float32)

    out = {'concentration': [alpha], 'expected_probability': [probs]}
    type_labels = [labels[:, None]]            # column 0 holds the type label

    res = evidential_learning_loss(out, type_labels, iteration=2500)
    jax.block_until_ready((res['loss'], res['accuracy']))
    print("KERNEL_OK")
</pallas_src>

<mosaic_0001>
module attributes {stable_mosaic.version = 11 : i64} {
  func.func @_edl_loss_kernel(%arg0: i32, %arg1: memref<1x1xf32, #tpu.memory_space<smem>>, %arg2: memref<1x1xi32, #tpu.memory_space<smem>>, %arg3: memref<1x128xi32, #tpu.memory_space<vmem>>, %arg4: memref<5x128xf32, #tpu.memory_space<vmem>>, %arg5: memref<5x128xf32, #tpu.memory_space<vmem>>, %arg6: memref<1x1x1xf32, #tpu.memory_space<vmem>>, %arg7: memref<1x1x1xf32, #tpu.memory_space<vmem>>) attributes {dimension_semantics = [#tpu.dimension_semantics<parallel>], iteration_bounds = array<i64: 1>, scalar_prefetch = 0 : i64, scratch_operands = 0 : i64, tpu.core_type = #tpu.core_type<tc>, window_params = [{transform_indices = @transform_0, window_bounds = array<i64: 1, 1>}, {transform_indices = @transform_1, window_bounds = array<i64: 1, 1>}, {transform_indices = @transform_2, window_bounds = array<i64: 1, 128>}, {transform_indices = @transform_3, window_bounds = array<i64: 5, 128>}, {transform_indices = @transform_4, window_bounds = array<i64: 5, 128>}, {transform_indices = @transform_5, window_bounds = array<i64: 1, 1, 1>}, {transform_indices = @transform_6, window_bounds = array<i64: 1, 1, 1>}]} {
    %c0 = arith.constant 0 : index
    %c0_0 = arith.constant 0 : index
    %0 = vector.load %arg4[%c0, %c0_0] : memref<5x128xf32, #tpu.memory_space<vmem>>, vector<5x128xf32>
    %c0_1 = arith.constant 0 : index
    %c0_2 = arith.constant 0 : index
    %1 = vector.load %arg5[%c0_1, %c0_2] : memref<5x128xf32, #tpu.memory_space<vmem>>, vector<5x128xf32>
    %c0_3 = arith.constant 0 : index
    %c0_4 = arith.constant 0 : index
    %2 = vector.load %arg3[%c0_3, %c0_4] : memref<1x128xi32, #tpu.memory_space<vmem>>, vector<1x128xi32>
    %c128_i32 = arith.constant 128 : i32
    %3 = arith.muli %arg0, %c128_i32 : i32
    %4 = tpu.iota {dimensions = array<i32: 1>} : vector<1x128xi32>
    %5 = vector.broadcast %3 : i32 to vector<1x128xi32>
    %6 = arith.addi %5, %4 : vector<1x128xi32>
    %c0_5 = arith.constant 0 : index
    %c0_6 = arith.constant 0 : index
    %7 = memref.load %arg2[%c0_5, %c0_6] : memref<1x1xi32, #tpu.memory_space<smem>>
    %8 = vector.broadcast %7 : i32 to vector<1x128xi32>
    %9 = arith.cmpi slt, %6, %8 : vector<1x128xi32>
    %10 = arith.extui %9 : vector<1x128xi1> to vector<1x128xi32>
    %11 = arith.sitofp %10 : vector<1x128xi32> to vector<1x128xf32>
    %12 = tpu.iota {dimensions = array<i32: 0>} : vector<5x128xi32>
    %13 = vector.broadcast %2 : vector<1x128xi32> to vector<5x128xi32>
    %14 = arith.cmpi eq, %12, %13 : vector<5x128xi32>
    %15 = arith.extui %14 : vector<5x128xi1> to vector<5x128xi32>
    %16 = arith.sitofp %15 : vector<5x128xi32> to vector<5x128xf32>
    %cst = arith.constant dense<0.000000e+00> : vector<128xf32>
    %17 = vector.multi_reduction <add>, %0, %cst [0] : vector<5x128xf32> to vector<128xf32>
    %18 = vector.shape_cast %17 : vector<128xf32> to vector<1x128xf32>
    %cst_7 = arith.constant 1.000000e+00 : f32
    %19 = vector.broadcast %cst_7 : f32 to vector<1x128xf32>
    %20 = arith.divf %19, %18 : vector<1x128xf32>
    %cst_8 = arith.constant 1.000000e+00 : f32
    %21 = vector.broadcast %cst_8 : f32 to vector<1x128xf32>
    %22 = arith.addf %18, %21 : vector<1x128xf32>
    %cst_9 = arith.constant 1.000000e+00 : f32
    %23 = vector.broadcast %cst_9 : f32 to vector<1x128xf32>
    %24 = arith.divf %23, %22 : vector<1x128xf32>
    %25 = vector.broadcast %20 : vector<1x128xf32> to vector<5x128xf32>
    %26 = arith.mulf %0, %25 : vector<5x128xf32>
    %27 = arith.subf %16, %26 : vector<5x128xf32>
    %28 = arith.mulf %27, %27 : vector<5x128xf32>
    %29 = vector.broadcast %18 : vector<1x128xf32> to vector<5x128xf32>
    %30 = arith.subf %29, %0 : vector<5x128xf32>
    %31 = arith.mulf %0, %30 : vector<5x128xf32>
    %32 = arith.mulf %20, %20 : vector<1x128xf32>
    %33 = arith.mulf %32, %24 : vector<1x128xf32>
    %34 = vector.broadcast %33 : vector<1x128xf32> to vector<5x128xf32>
    %35 = arith.mulf %31, %34 : vector<5x128xf32>
    %36 = arith.addf %28, %35 : vector<5x128xf32>
    %cst_10 = arith.constant dense<0.000000e+00> : vector<128xf32>
    %37 = vector.multi_reduction <add>, %36, %cst_10 [0] : vector<5x128xf32> to vector<128xf32>
    %38 = vector.shape_cast %37 : vector<128xf32> to vector<1x128xf32>
    %cst_11 = arith.constant 1.000000e+00 : f32
    %39 = vector.broadcast %cst_11 : f32 to vector<5x128xf32>
    %40 = arith.subf %39, %16 : vector<5x128xf32>
    %41 = arith.mulf %40, %0 : vector<5x128xf32>
    %42 = arith.addf %16, %41 : vector<5x128xf32>
    %cst_12 = arith.constant dense<0.000000e+00> : vector<128xf32>
    %43 = vector.multi_reduction <add>, %42, %cst_12 [0] : vector<5x128xf32> to vector<128xf32>
    %44 = vector.shape_cast %43 : vector<128xf32> to vector<1x128xf32>
    %cst_13 = arith.constant 1.000000e+00 : f32
    %45 = vector.broadcast %cst_13 : f32 to vector<5x128xf32>
    %46 = arith.addf %42, %45 : vector<5x128xf32>
    %cst_14 = arith.constant 2.000000e+00 : f32
    %47 = vector.broadcast %cst_14 : f32 to vector<5x128xf32>
    %48 = arith.addf %42, %47 : vector<5x128xf32>
    %cst_15 = arith.constant 3.000000e+00 : f32
    %49 = vector.broadcast %cst_15 : f32 to vector<5x128xf32>
    %50 = arith.addf %42, %49 : vector<5x128xf32>
    %cst_16 = arith.constant 4.000000e+00 : f32
    %51 = vector.broadcast %cst_16 : f32 to vector<5x128xf32>
    %52 = arith.addf %42, %51 : vector<5x128xf32>
    %cst_17 = arith.constant 5.000000e+00 : f32
    %53 = vector.broadcast %cst_17 : f32 to vector<5x128xf32>
    %54 = arith.addf %42, %53 : vector<5x128xf32>
    %cst_18 = arith.constant 6.000000e+00 : f32
    %55 = vector.broadcast %cst_18 : f32 to vector<5x128xf32>
    %56 = arith.addf %42, %55 : vector<5x128xf32>
    %57 = arith.mulf %42, %46 : vector<5x128xf32>
    %58 = arith.mulf %48, %50 : vector<5x128xf32>
    %59 = arith.mulf %52, %54 : vector<5x128xf32>
    %60 = arith.mulf %57, %58 : vector<5x128xf32>
    %61 = arith.mulf %60, %59 : vector<5x128xf32>
    %62 = math.log %61 : vector<5x128xf32>
    %63 = arith.addf %42, %46 : vector<5x128xf32>
    %64 = arith.divf %63, %57 : vector<5x128xf32>
    %65 = arith.addf %48, %50 : vector<5x128xf32>
    %66 = arith.divf %65, %58 : vector<5x128xf32>
    %67 = arith.addf %64, %66 : vector<5x128xf32>
    %68 = arith.addf %52, %54 : vector<5x128xf32>
    %69 = arith.divf %68, %59 : vector<5x128xf32>
    %70 = arith.addf %67, %69 : vector<5x128xf32>
    %cst_19 = arith.constant 1.000000e+00 : f32
    %71 = vector.broadcast %cst_19 : f32 to vector<5x128xf32>
    %72 = arith.divf %71, %56 : vector<5x128xf32>
    %73 = arith.mulf %72, %72 : vector<5x128xf32>
    %74 = math.log %56 : vector<5x128xf32>
    %cst_20 = arith.constant 5.000000e-01 : f32
    %75 = vector.broadcast %cst_20 : f32 to vector<5x128xf32>
    %76 = arith.subf %56, %75 : vector<5x128xf32>
    %77 = arith.mulf %76, %74 : vector<5x128xf32>
    %78 = arith.subf %77, %56 : vector<5x128xf32>
    %cst_21 = arith.constant 0.918938517 : f32
    %79 = vector.broadcast %cst_21 : f32 to vector<5x128xf32>
    %80 = arith.addf %78, %79 : vector<5x128xf32>
    %cst_22 = arith.constant -5.95238118E-4 : f32
    %81 = vector.broadcast %cst_22 : f32 to vector<5x128xf32>
    %82 = arith.mulf %73, %81 : vector<5x128xf32>
    %cst_23 = arith.constant 7.93650805E-4 : f32
    %83 = vector.broadcast %cst_23 : f32 to vector<5x128xf32>
    %84 = arith.addf %83, %82 : vector<5x128xf32>
    %85 = arith.mulf %73, %84 : vector<5x128xf32>
    %cst_24 = arith.constant -0.00277777785 : f32
    %86 = vector.broadcast %cst_24 : f32 to vector<5x128xf32>
    %87 = arith.addf %86, %85 : vector<5x128xf32>
    %88 = arith.mulf %73, %87 : vector<5x128xf32>
    %cst_25 = arith.constant 0.0833333358 : f32
    %89 = vector.broadcast %cst_25 : f32 to vector<5x128xf32>
    %90 = arith.addf %89, %88 : vector<5x128xf32>
    %91 = arith.mulf %72, %90 : vector<5x128xf32>
    %92 = arith.addf %80, %91 : vector<5x128xf32>
    %93 = arith.subf %92, %62 : vector<5x128xf32>
    %cst_26 = arith.constant 5.000000e-01 : f32
    %94 = vector.broadcast %cst_26 : f32 to vector<5x128xf32>
    %95 = arith.mulf %94, %72 : vector<5x128xf32>
    %96 = arith.subf %74, %95 : vector<5x128xf32>
    %cst_27 = arith.constant 0.0039682542 : f32
    %97 = vector.broadcast %cst_27 : f32 to vector<5x128xf32>
    %98 = arith.mulf %73, %97 : vector<5x128xf32>
    %cst_28 = arith.constant 0.00833333377 : f32
    %99 = vector.broadcast %cst_28 : f32 to vector<5x128xf32>
    %100 = arith.subf %99, %98 : vector<5x128xf32>
    %101 = arith.mulf %73, %100 : vector<5x128xf32>
    %cst_29 = arith.constant 0.0833333358 : f32
    %102 = vector.broadcast %cst_29 : f32 to vector<5x128xf32>
    %103 = arith.subf %102, %101 : vector<5x128xf32>
    %104 = arith.mulf %73, %103 : vector<5x128xf32>
    %105 = arith.subf %96, %104 : vector<5x128xf32>
    %106 = arith.subf %105, %70 : vector<5x128xf32>
    %cst_30 = arith.constant 1.000000e+00 : f32
    %107 = vector.broadcast %cst_30 : f32 to vector<1x128xf32>
    %108 = arith.addf %44, %107 : vector<1x128xf32>
    %cst_31 = arith.constant 2.000000e+00 : f32
    %109 = vector.broadcast %cst_31 : f32 to vector<1x128xf32>
    %110 = arith.addf %44, %109 : vector<1x128xf32>
    %cst_32 = arith.constant 3.000000e+00 : f32
    %111 = vector.broadcast %cst_32 : f32 to vector<1x128xf32>
    %112 = arith.addf %44, %111 : vector<1x128xf32>
    %cst_33 = arith.constant 4.000000e+00 : f32
    %113 = vector.broadcast %cst_33 : f32 to vector<1x128xf32>
    %114 = arith.addf %44, %113 : vector<1x128xf32>
    %cst_34 = arith.constant 5.000000e+00 : f32
    %115 = vector.broadcast %cst_34 : f32 to vector<1x128xf32>
    %116 = arith.addf %44, %115 : vector<1x128xf32>
    %cst_35 = arith.constant 6.000000e+00 : f32
    %117 = vector.broadcast %cst_35 : f32 to vector<1x128xf32>
    %118 = arith.addf %44, %117 : vector<1x128xf32>
    %119 = arith.mulf %44, %108 : vector<1x128xf32>
    %120 = arith.mulf %110, %112 : vector<1x128xf32>
    %121 = arith.mulf %114, %116 : vector<1x128xf32>
    %122 = arith.mulf %119, %120 : vector<1x128xf32>
    %123 = arith.mulf %122, %121 : vector<1x128xf32>
    %124 = math.log %123 : vector<1x128xf32>
    %125 = arith.addf %44, %108 : vector<1x128xf32>
    %126 = arith.divf %125, %119 : vector<1x128xf32>
    %127 = arith.addf %110, %112 : vector<1x128xf32>
    %128 = arith.divf %127, %120 : vector<1x128xf32>
    %129 = arith.addf %126, %128 : vector<1x128xf32>
    %130 = arith.addf %114, %116 : vector<1x128xf32>
    %131 = arith.divf %130, %121 : vector<1x128xf32>
    %132 = arith.addf %129, %131 : vector<1x128xf32>
    %cst_36 = arith.constant 1.000000e+00 : f32
    %133 = vector.broadcast %cst_36 : f32 to vector<1x128xf32>
    %134 = arith.divf %133, %118 : vector<1x128xf32>
    %135 = arith.mulf %134, %134 : vector<1x128xf32>
    %136 = math.log %118 : vector<1x128xf32>
    %cst_37 = arith.constant 5.000000e-01 : f32
    %137 = vector.broadcast %cst_37 : f32 to vector<1x128xf32>
    %138 = arith.subf %118, %137 : vector<1x128xf32>
    %139 = arith.mulf %138, %136 : vector<1x128xf32>
    %140 = arith.subf %139, %118 : vector<1x128xf32>
    %cst_38 = arith.constant 0.918938517 : f32
    %141 = vector.broadcast %cst_38 : f32 to vector<1x128xf32>
    %142 = arith.addf %140, %141 : vector<1x128xf32>
    %cst_39 = arith.constant -5.95238118E-4 : f32
    %143 = vector.broadcast %cst_39 : f32 to vector<1x128xf32>
    %144 = arith.mulf %135, %143 : vector<1x128xf32>
    %cst_40 = arith.constant 7.93650805E-4 : f32
    %145 = vector.broadcast %cst_40 : f32 to vector<1x128xf32>
    %146 = arith.addf %145, %144 : vector<1x128xf32>
    %147 = arith.mulf %135, %146 : vector<1x128xf32>
    %cst_41 = arith.constant -0.00277777785 : f32
    %148 = vector.broadcast %cst_41 : f32 to vector<1x128xf32>
    %149 = arith.addf %148, %147 : vector<1x128xf32>
    %150 = arith.mulf %135, %149 : vector<1x128xf32>
    %cst_42 = arith.constant 0.0833333358 : f32
    %151 = vector.broadcast %cst_42 : f32 to vector<1x128xf32>
    %152 = arith.addf %151, %150 : vector<1x128xf32>
    %153 = arith.mulf %134, %152 : vector<1x128xf32>
    %154 = arith.addf %142, %153 : vector<1x128xf32>
    %155 = arith.subf %154, %124 : vector<1x128xf32>
    %cst_43 = arith.constant 5.000000e-01 : f32
    %156 = vector.broadcast %cst_43 : f32 to vector<1x128xf32>
    %157 = arith.mulf %156, %134 : vector<1x128xf32>
    %158 = arith.subf %136, %157 : vector<1x128xf32>
    %cst_44 = arith.constant 0.0039682542 : f32
    %159 = vector.broadcast %cst_44 : f32 to vector<1x128xf32>
    %160 = arith.mulf %135, %159 : vector<1x128xf32>
    %cst_45 = arith.constant 0.00833333377 : f32
    %161 = vector.broadcast %cst_45 : f32 to vector<1x128xf32>
    %162 = arith.subf %161, %160 : vector<1x128xf32>
    %163 = arith.mulf %135, %162 : vector<1x128xf32>
    %cst_46 = arith.constant 0.0833333358 : f32
    %164 = vector.broadcast %cst_46 : f32 to vector<1x128xf32>
    %165 = arith.subf %164, %163 : vector<1x128xf32>
    %166 = arith.mulf %135, %165 : vector<1x128xf32>
    %167 = arith.subf %158, %166 : vector<1x128xf32>
    %168 = arith.subf %167, %132 : vector<1x128xf32>
    %cst_47 = arith.constant 1.000000e+00 : f32
    %169 = vector.broadcast %cst_47 : f32 to vector<5x128xf32>
    %170 = arith.subf %42, %169 : vector<5x128xf32>
    %171 = vector.broadcast %168 : vector<1x128xf32> to vector<5x128xf32>
    %172 = arith.subf %106, %171 : vector<5x128xf32>
    %173 = arith.mulf %170, %172 : vector<5x128xf32>
    %174 = arith.subf %173, %93 : vector<5x128xf32>
    %cst_48 = arith.constant 3.17805386 : f32
    %175 = vector.broadcast %cst_48 : f32 to vector<1x128xf32>
    %176 = arith.subf %155, %175 : vector<1x128xf32>
    %cst_49 = arith.constant dense<0.000000e+00> : vector<128xf32>
    %177 = vector.multi_reduction <add>, %174, %cst_49 [0] : vector<5x128xf32> to vector<128xf32>
    %178 = vector.shape_cast %177 : vector<128xf32> to vector<1x128xf32>
    %179 = arith.addf %176, %178 : vector<1x128xf32>
    %c0_50 = arith.constant 0 : index
    %c0_51 = arith.constant 0 : index
    %180 = memref.load %arg1[%c0_50, %c0_51] : memref<1x1xf32, #tpu.memory_space<smem>>
    %181 = vector.broadcast %180 : f32 to vector<1x128xf32>
    %182 = arith.mulf %181, %179 : vector<1x128xf32>
    %183 = arith.addf %38, %182 : vector<1x128xf32>
    %184 = arith.mulf %183, %11 : vector<1x128xf32>
    %185 = vector.shape_cast %184 : vector<1x128xf32> to vector<1x1x128xf32>
    %cst_52 = arith.constant dense<0.000000e+00> : vector<1xf32>
    %186 = vector.multi_reduction <add>, %185, %cst_52 [1, 2] : vector<1x1x128xf32> to vector<1xf32>
    %187 = vector.shape_cast %186 : vector<1xf32> to vector<1x1x1xf32>
    %188 = vector.extract %187[0, 0, 0] : f32 from vector<1x1x1xf32>
    %189 = vector.broadcast %188 : f32 to vector<1x1x1xf32>
    %c0_53 = arith.constant 0 : index
    %c0_54 = arith.constant 0 : index
    %c0_55 = arith.constant 0 : index
    %190 = vector.load %arg6[%c0_53, %c0_54, %c0_55] : memref<1x1x1xf32, #tpu.memory_space<vmem>>, vector<1x1x1xf32>
    tpu.vector_store %arg6[%c0_53, %c0_54, %c0_55], %189 {strides = array<i32>} : memref<1x1x1xf32, #tpu.memory_space<vmem>>, vector<1x1x1xf32>,
    %cst_56 = arith.constant dense<0xFF800000> : vector<128xf32>
    %191 = vector.multi_reduction <maximumf>, %1, %cst_56 [0] : vector<5x128xf32> to vector<128xf32>
    %192 = vector.shape_cast %191 : vector<128xf32> to vector<1x128xf32>
    %193 = vector.broadcast %192 : vector<1x128xf32> to vector<5x128xf32>
    %194 = arith.cmpf oeq, %1, %193 : vector<5x128xf32>
    %195 = arith.sitofp %12 : vector<5x128xi32> to vector<5x128xf32>
    %cst_57 = arith.constant 5.000000e+00 : f32
    %196 = vector.broadcast %cst_57 : f32 to vector<5x128xf32>
    %197 = arith.select %194, %195, %196 : vector<5x128xi1>, vector<5x128xf32>
    %cst_58 = arith.constant dense<0x7F800000> : vector<128xf32>
    %198 = vector.multi_reduction <minimumf>, %197, %cst_58 [0] : vector<5x128xf32> to vector<128xf32>
    %199 = vector.shape_cast %198 : vector<128xf32> to vector<1x128xf32>
    %200 = arith.sitofp %2 : vector<1x128xi32> to vector<1x128xf32>
    %201 = arith.cmpf oeq, %199, %200 : vector<1x128xf32>
    %202 = arith.extui %201 : vector<1x128xi1> to vector<1x128xi32>
    %203 = arith.sitofp %202 : vector<1x128xi32> to vector<1x128xf32>
    %204 = arith.mulf %203, %11 : vector<1x128xf32>
    %205 = vector.shape_cast %204 : vector<1x128xf32> to vector<1x1x128xf32>
    %cst_59 = arith.constant dense<0.000000e+00> : vector<1xf32>
    %206 = vector.multi_reduction <add>, %205, %cst_59 [1, 2] : vector<1x1x128xf32> to vector<1xf32>
    %207 = vector.shape_cast %206 : vector<1xf32> to vector<1x1x1xf32>
    %208 = vector.extract %207[0, 0, 0] : f32 from vector<1x1x1xf32>
    %209 = vector.broadcast %208 : f32 to vector<1x1x1xf32>
    %c0_60 = arith.constant 0 : index
    %c0_61 = arith.constant 0 : index
    %c0_62 = arith.constant 0 : index
    %210 = vector.load %arg7[%c0_60, %c0_61, %c0_62] : memref<1x1x1xf32, #tpu.memory_space<vmem>>, vector<1x1x1xf32>
    tpu.vector_store %arg7[%c0_60, %c0_61, %c0_62], %209 {strides = array<i32>} : memref<1x1x1xf32, #tpu.memory_space<vmem>>, vector<1x1x1xf32>,
    return
  }
  func.func @transform_0(%arg0: i32) -> (i32, i32) {
    %c0_i32 = arith.constant 0 : i32
    %c0_i32_0 = arith.constant 0 : i32
    %c0_i32_1 = arith.constant 0 : i32
    return %c0_i32, %c0_i32_0 : i32, i32
  }
  func.func @transform_1(%arg0: i32) -> (i32, i32) {
    %c0_i32 = arith.constant 0 : i32
    %c0_i32_0 = arith.constant 0 : i32
    %c0_i32_1 = arith.constant 0 : i32
    return %c0_i32, %c0_i32_0 : i32, i32
  }
  func.func @transform_2(%arg0: i32) -> (i32, i32) {
    %c0_i32 = arith.constant 0 : i32
    %c0_i32_0 = arith.constant 0 : i32
    return %c0_i32, %arg0 : i32, i32
  }
  func.func @transform_3(%arg0: i32) -> (i32, i32) {
    %c0_i32 = arith.constant 0 : i32
    %c0_i32_0 = arith.constant 0 : i32
    return %c0_i32, %arg0 : i32, i32
  }
  func.func @transform_4(%arg0: i32) -> (i32, i32) {
    %c0_i32 = arith.constant 0 : i32
    %c0_i32_0 = arith.constant 0 : i32
    return %c0_i32, %arg0 : i32, i32
  }
  func.func @transform_5(%arg0: i32) -> (i32, i32, i32) {
    %c0_i32 = arith.constant 0 : i32
    %c0_i32_0 = arith.constant 0 : i32
    %c0_i32_1 = arith.constant 0 : i32
    return %arg0, %c0_i32, %c0_i32_0 : i32, i32, i32
  }
  func.func @transform_6(%arg0: i32) -> (i32, i32, i32) {
    %c0_i32 = arith.constant 0 : i32
    %c0_i32_0 = arith.constant 0 : i32
    %c0_i32_1 = arith.constant 0 : i32
    return %arg0, %c0_i32, %c0_i32_0 : i32, i32, i32
  }
}

</mosaic_0001>

<llo_original>
// kernel: tpu_custom_call.1
$region0: #{tpu_custom_call.1}
  #allocation0 [shape = 'u32[]', space=smem, size = 0x4, offset = 0x4, fixed_abs, tag = 'smem constant byte address 0x4 - core index']
  #allocation1 [shape = 'u32[72,128]{1,0:T(1,128)}', space=vmem, size = 0x9000, scoped, tag = 'internal scratch']
  #allocation2 [shape = 'f32[1,1]{1,0:T(1,128)S(6)}', space=smem, size = 0x200, scoped, tag = 'scoped memory for tpu_custom_call.1']
  #allocation3 [shape = 's32[1,1]{1,0:T(1,128)S(6)}', space=smem, size = 0x200, scoped, tag = 'scoped memory for tpu_custom_call.1']
  %s0 = inlined_call_operand.<no memory space> [shape: f32[1,1], index: 0, kind: input, shape index: {}]
  %s1 = inlined_call_operand.<no memory space> [shape: s32[1,1], index: 1, kind: input, shape index: {}]
  %s2 = inlined_call_operand.vmem [shape: s32[1,128], index: 2, kind: input, shape index: {}]
  %s3 = inlined_call_operand.hbm [shape: f32[5,128], index: 3, kind: input, shape index: {}]
  %s4 = inlined_call_operand.hbm [shape: f32[5,128], index: 4, kind: input, shape index: {}]
  %s5 = inlined_call_operand.hbm [shape: f32[1,1,1], index: 5, kind: output, shape index: {0}]
  %s6 = inlined_call_operand.hbm [shape: f32[1,1,1], index: 6, kind: output, shape index: {1}]
  %7 = xla_tuple %s5, %s6
  %s8 = sld [smem:[#allocation0]]
  $region46: #{tpu_custom_call.1} parent=0
    _
  %s10 = ssub.s32 1, %s8
  %s11 = scalar_select 0, %s10, %s8
  %12 = sst [smem:[#allocation2]] %s0
  %13 = sst [smem:[#allocation3]] %s1
  $region1: #{tpu_custom_call.1} parent=0
    #allocation4 [shape = 'u8[4096]{0}', space=vmem, size = 0x1000, scoped, tag = 'input window, operand 3, single buffered']
    #allocation5 [shape = 's32[1]{0}', space=sflag, size = 0x4, scoped, tag = 'scoped memory for tpu_custom_call.1']
    #allocation6 [shape = 's32[1]{0}', space=sflag, size = 0x4, scoped, tag = 'scoped memory for tpu_custom_call.1']
    #allocation7 [shape = 'u8[4096]{0}', space=vmem, size = 0x1000, scoped, tag = 'input window, operand 4, single buffered']
    #allocation8 [shape = 's32[1]{0}', space=sflag, size = 0x4, scoped, tag = 'scoped memory for tpu_custom_call.1']
    #allocation9 [shape = 'u8[512]{0}', space=vmem, size = 0x400, scoped, tag = 'output window, operand 0, single buffered']
    #allocation10 [shape = 'u8[512]{0}', space=vmem, size = 0x400, scoped, tag = 'output window, operand 1, single buffered']
    #allocation11 [shape = 's32[1]{0}', space=sflag, size = 0x4, scoped, tag = 'scoped memory for tpu_custom_call.1']
    %14 = vsyncpa [#allocation5], 0
    %15 = vsyncpa [#allocation8], 0
    %16 = vsyncpa [#allocation6], 0
    %17 = vsyncpa [#allocation11], 0
    // Predicated region
    $region2: #{tpu_custom_call.1} parent=1 // pred_check
      _
    $region3: #{tpu_custom_call.1} parent=1 // pred_check_branch
      %19 = sbr.rel (0) target = $region5
    $region4: #{tpu_custom_call.1} parent=1 // pred_region
      _
    $region5: #{tpu_custom_call.1} parent=1 // pred_fallthru
      _
    // Predicated region
    $region6: #{tpu_custom_call.1} parent=1 // pred_check
      _
    $region7: #{tpu_custom_call.1} parent=1 // pred_check_branch
      %21 = sbr.rel (0) target = $region9
    $region8: #{tpu_custom_call.1} parent=1 // pred_region
      _
    $region9: #{tpu_custom_call.1} parent=1 // pred_fallthru
      _
    // Predicated region
    $region10: #{tpu_custom_call.1} parent=1 // pred_check
      _
    $region11: #{tpu_custom_call.1} parent=1 // pred_check_branch
      %23 = sbr.rel (0) target = $region13
    $region12: #{tpu_custom_call.1} parent=1 // pred_region
      _
    $region13: #{tpu_custom_call.1} parent=1 // pred_fallthru
      _
    // Predicated region
    $region14: #{tpu_custom_call.1} parent=1 // pred_check
      _
    $region15: #{tpu_custom_call.1} parent=1 // pred_check_branch
      %25 = sbr.rel (0) target = $region17
    $region16: #{tpu_custom_call.1} parent=1 // pred_region
      %27 = vsyncadd [#allocation5], 0
      %s29 = sshll.u32 %s3, 4
      %s30 = int_to_ptr.hbm [resolvable:$true] %s29
      %s31 = sshll.u32 [#allocation4], 4
      %s32 = int_to_ptr.vmem [resolvable:$true] %s31
      %34 = dma.hbm_to_vmem [thread:$0]  %s30, 128, %s32, [#allocation5]
    $region17: #{tpu_custom_call.1} parent=1 // pred_fallthru
      _
    // Predicated region
    $region18: #{tpu_custom_call.1} parent=1 // pred_check
      _
    $region19: #{tpu_custom_call.1} parent=1 // pred_check_branch
      %36 = sbr.rel (0) target = $region21
    $region20: #{tpu_custom_call.1} parent=1 // pred_region
      %38 = vsyncadd [#allocation8], 0
      %s40 = sshll.u32 %s4, 4
      %s41 = int_to_ptr.hbm [resolvable:$true] %s40
      %s42 = sshll.u32 [#allocation7], 4
      %s43 = int_to_ptr.vmem [resolvable:$true] %s42
      %45 = dma.hbm_to_vmem [thread:$0]  %s41, 128, %s43, [#allocation8]
    $region21: #{tpu_custom_call.1} parent=1 // pred_fallthru
      _
    // Predicated region
    $region22: #{tpu_custom_call.1} parent=1 // pred_check
      _
    $region23: #{tpu_custom_call.1} parent=1 // pred_check_branch
      %47 = sbr.rel (0) target = $region25
    $region24: #{tpu_custom_call.1} parent=1 // pred_region
      %49 = dma.done [#allocation5], 128
    $region25: #{tpu_custom_call.1} parent=1 // pred_fallthru
      _
    // Predicated region
    $region26: #{tpu_custom_call.1} parent=1 // pred_check
      _
    $region27: #{tpu_custom_call.1} parent=1 // pred_check_branch
      %51 = sbr.rel (0) target = $region29
    $region28: #{tpu_custom_call.1} parent=1 // pred_region
      %53 = dma.done [#allocation8], 128
    $region29: #{tpu_custom_call.1} parent=1 // pred_fallthru
      _
    %v54 = vld [vmem:[#allocation4] sm:$0x1f]
    %v55 = vld [vmem:[#allocation7] sm:$0x1f]
    %v56 = vld [vmem:[%s2] sm:$0x1]
    %s57 = smul.u32 0, 128
    %v58 = vlaneseq
    %v59 = vand.u32 %v58, 127
    %v60 = vstv %s57
    %v61 = vadd.s32 %v60, %v59
    %s62 = sld [smem:[#allocation3]]
    %v63 = vstv %s62
    %vm64 = vcmp.lt.s32.totalorder %v61, %v63
    %v65 = vsel %vm64, 1, 0
    %v66 = vcvt.s32.f32 %v65
    %v67 = vlaneseq
    %v68 = vshrl.u32 %v67, 7
    %v69 = vperm.slane %v56, 0
    %vm70 = vcmp.eq.s32.totalorder %v68, %v69
    %v71 = vsel %vm70, 1, 0
    %v72 = vcvt.s32.f32 %v71
    %vm73 = vcmask 1044480
    %v74 = vsel %vm73, %v54, 0.0
    %v75 = vrot.slane %v74, 4
    %v76 = vadd.f32 %v74, %v75
    %v77 = vrot.slane %v76, 2
    %v78 = vadd.f32 %v76, %v77
    %v79 = vrot.slane %v78, 1
    %v80 = vadd.f32 %v78, %v79
    %v81 = vrcp.pop %v80
    %v82 = vmul.f32 %v80, %v81
    %v83 = vsub.f32 1.0, %v82
    %v84 = vmul.f32 %v81, %v83
    %v85 = vadd.f32 %v81, %v84
    %vm86 = vweird.f32 %v80
    %vm87 = vweird.f32 %v81
    %vm88 = vmor %vm86, %vm87
    %v89 = vsel %vm88, %v81, %v85
    %v90 = vand.u32 2147483647, %v80
    %vm91 = vcmp.eq.f32.partialorder %v90, 8.507059e+37
    %v92 = vand.u32 %v80, 2147483648
    %v93 = vor.u32 1.1754944e-38, %v92
    %v94 = vsel %vm91, %v93, %v89
    %v95 = vmul.f32 1.0, %v94
    %v96 = vadd.f32 %v80, 1.0
    %v97 = vrcp.pop %v96
    %v98 = vmul.f32 %v96, %v97
    %v99 = vsub.f32 1.0, %v98
    %v100 = vmul.f32 %v97, %v99
    %v101 = vadd.f32 %v97, %v100
    %vm102 = vweird.f32 %v96
    %vm103 = vweird.f32 %v97
    %vm104 = vmor %vm102, %vm103
    %v105 = vsel %vm104, %v97, %v101
    %v106 = vand.u32 2147483647, %v96
    %vm107 = vcmp.eq.f32.partialorder %v106, 8.507059e+37
    %v108 = vand.u32 %v96, 2147483648
    %v109 = vor.u32 1.1754944e-38, %v108
    %v110 = vsel %vm107, %v109, %v105
    %v111 = vmul.f32 1.0, %v110
    %v112 = vmul.f32 %v54, %v95
    %v113 = vsub.f32 %v72, %v112
    %v114 = vmul.f32 %v113, %v113
    %v115 = vsub.f32 %v80, %v54
    %v116 = vmul.f32 %v54, %v115
    %v117 = vmul.f32 %v95, %v95
    %v118 = vmul.f32 %v117, %v111
    %v119 = vmul.f32 %v116, %v118
    %v120 = vadd.f32 %v114, %v119
    %v121 = vsel %vm73, %v120, 0.0
    %v122 = vrot.slane %v121, 4
    %v123 = vadd.f32 %v121, %v122
    %v124 = vrot.slane %v123, 2
    %v125 = vadd.f32 %v123, %v124
    %v126 = vrot.slane %v125, 1
    %v127 = vadd.f32 %v125, %v126
    %v128 = vsub.f32 1.0, %v72
    %v129 = vmul.f32 %v128, %v54
    %v130 = vadd.f32 %v72, %v129
    %v131 = vsel %vm73, %v130, 0.0
    %v132 = vrot.slane %v131, 4
    %v133 = vadd.f32 %v131, %v132
    %v134 = vrot.slane %v133, 2
    %v135 = vadd.f32 %v133, %v134
    %v136 = vrot.slane %v135, 1
    %v137 = vadd.f32 %v135, %v136
    %v138 = vadd.f32 %v130, 1.0
    %v139 = vadd.f32 %v130, 2.0
    %v140 = vadd.f32 %v130, 3.0
    %v141 = vadd.f32 %v130, 4.0
    %v142 = vadd.f32 %v130, 5.0
    %v143 = vadd.f32 %v130, 6.0
    %v144 = vmul.f32 %v130, %v138
    %v145 = vmul.f32 %v139, %v140
    %v146 = vmul.f32 %v141, %v142
    %v147 = vmul.f32 %v144, %v145
    %v148 = vmul.f32 %v147, %v146
    %v149 = vlog2.pop %v148
    %v150 = vmul.f32 %v149, 0.6931472
    %v151 = vadd.f32 %v130, %v138
    %v152 = vrcp.pop %v144
    %v153 = vmul.f32 %v144, %v152
    %v154 = vsub.f32 1.0, %v153
    %v155 = vmul.f32 %v152, %v154
    %v156 = vadd.f32 %v152, %v155
    %vm157 = vweird.f32 %v144
    %vm158 = vweird.f32 %v152
    %vm159 = vmor %vm157, %vm158
    %v160 = vsel %vm159, %v152, %v156
    %v161 = vand.u32 2147483647, %v144
    %vm162 = vcmp.eq.f32.partialorder %v161, 8.507059e+37
    %v163 = vand.u32 %v144, 2147483648
    %v164 = vor.u32 1.1754944e-38, %v163
    %v165 = vsel %vm162, %v164, %v160
    %v166 = vmul.f32 %v151, %v165
    %v167 = vadd.f32 %v139, %v140
    %v168 = vrcp.pop %v145
    %v169 = vmul.f32 %v145, %v168
    %v170 = vsub.f32 1.0, %v169
    %v171 = vmul.f32 %v168, %v170
    %v172 = vadd.f32 %v168, %v171
    %vm173 = vweird.f32 %v145
    %vm174 = vweird.f32 %v168
    %vm175 = vmor %vm173, %vm174
    %v176 = vsel %vm175, %v168, %v172
    %v177 = vand.u32 2147483647, %v145
    %vm178 = vcmp.eq.f32.partialorder %v177, 8.507059e+37
    %v179 = vand.u32 %v145, 2147483648
    %v180 = vor.u32 1.1754944e-38, %v179
    %v181 = vsel %vm178, %v180, %v176
    %v182 = vmul.f32 %v167, %v181
    %v183 = vadd.f32 %v166, %v182
    %v184 = vadd.f32 %v141, %v142
    %v185 = vrcp.pop %v146
    %v186 = vmul.f32 %v146, %v185
    %v187 = vsub.f32 1.0, %v186
    %v188 = vmul.f32 %v185, %v187
    %v189 = vadd.f32 %v185, %v188
    %vm190 = vweird.f32 %v146
    %vm191 = vweird.f32 %v185
    %vm192 = vmor %vm190, %vm191
    %v193 = vsel %vm192, %v185, %v189
    %v194 = vand.u32 2147483647, %v146
    %vm195 = vcmp.eq.f32.partialorder %v194, 8.507059e+37
    %v196 = vand.u32 %v146, 2147483648
    %v197 = vor.u32 1.1754944e-38, %v196
    %v198 = vsel %vm195, %v197, %v193
    %v199 = vmul.f32 %v184, %v198
    %v200 = vadd.f32 %v183, %v199
    %v201 = vrcp.pop %v143
    %v202 = vmul.f32 %v143, %v201
    %v203 = vsub.f32 1.0, %v202
    %v204 = vmul.f32 %v201, %v203
    %v205 = vadd.f32 %v201, %v204
    %vm206 = vweird.f32 %v143
    %vm207 = vweird.f32 %v201
    %vm208 = vmor %vm206, %vm207
    %v209 = vsel %vm208, %v201, %v205
    %v210 = vand.u32 2147483647, %v143
    %vm211 = vcmp.eq.f32.partialorder %v210, 8.507059e+37
    %v212 = vand.u32 %v143, 2147483648
    %v213 = vor.u32 1.1754944e-38, %v212
    %v214 = vsel %vm211, %v213, %v209
    %v215 = vmul.f32 1.0, %v214
    %v216 = vmul.f32 %v215, %v215
    %v217 = vlog2.pop %v143
    %v218 = vmul.f32 %v217, 0.6931472
    %v219 = vsub.f32 %v143, 0.5
    %v220 = vmul.f32 %v219, %v218
    %v221 = vsub.f32 %v220, %v143
    %v222 = vadd.f32 %v221, 0.9189385
    %v223 = vmul.f32 %v216, -0.0005952381
    %v224 = vadd.f32 %v223, 0.0007936508
    %v225 = vmul.f32 %v216, %v224
    %v226 = vadd.f32 %v225, -0.0027777778
    %v227 = vmul.f32 %v216, %v226
    %v228 = vadd.f32 %v227, 0.083333336
    %v229 = vmul.f32 %v215, %v228
    %v230 = vadd.f32 %v222, %v229
    %v231 = vsub.f32 %v230, %v150
    %v232 = vmul.f32 %v215, 0.5
    %v233 = vsub.f32 %v218, %v232
    %v234 = vmul.f32 %v216, 0.003968254
    %v235 = vsub.f32 0.008333334, %v234
    %v236 = vmul.f32 %v216, %v235
    %v237 = vsub.f32 0.083333336, %v236
    %v238 = vmul.f32 %v216, %v237
    %v239 = vsub.f32 %v233, %v238
    %v240 = vsub.f32 %v239, %v200
    %v241 = vadd.f32 %v137, 1.0
    %v242 = vadd.f32 %v137, 2.0
    %v243 = vadd.f32 %v137, 3.0
    %v244 = vadd.f32 %v137, 4.0
    %v245 = vadd.f32 %v137, 5.0
    %v246 = vadd.f32 %v137, 6.0
    %v247 = vmul.f32 %v137, %v241
    %v248 = vmul.f32 %v242, %v243
    %v249 = vmul.f32 %v244, %v245
    %v250 = vmul.f32 %v247, %v248
    %v251 = vmul.f32 %v250, %v249
    %v252 = vlog2.pop %v251
    %v253 = vmul.f32 %v252, 0.6931472
    %v254 = vadd.f32 %v137, %v241
    %v255 = vrcp.pop %v247
    %v256 = vmul.f32 %v247, %v255
    %v257 = vsub.f32 1.0, %v256
    %v258 = vmul.f32 %v255, %v257
    %v259 = vadd.f32 %v255, %v258
    %vm260 = vweird.f32 %v247
    %vm261 = vweird.f32 %v255
    %vm262 = vmor %vm260, %vm261
    %v263 = vsel %vm262, %v255, %v259
    %v264 = vand.u32 2147483647, %v247
    %vm265 = vcmp.eq.f32.partialorder %v264, 8.507059e+37
    %v266 = vand.u32 %v247, 2147483648
    %v267 = vor.u32 1.1754944e-38, %v266
    %v268 = vsel %vm265, %v267, %v263
    %v269 = vmul.f32 %v254, %v268
    %v270 = vadd.f32 %v242, %v243
    %v271 = vrcp.pop %v248
    %v272 = vmul.f32 %v248, %v271
    %v273 = vsub.f32 1.0, %v272
    %v274 = vmul.f32 %v271, %v273
    %v275 = vadd.f32 %v271, %v274
    %vm276 = vweird.f32 %v248
    %vm277 = vweird.f32 %v271
    %vm278 = vmor %vm276, %vm277
    %v279 = vsel %vm278, %v271, %v275
    %v280 = vand.u32 2147483647, %v248
    %vm281 = vcmp.eq.f32.partialorder %v280, 8.507059e+37
    %v282 = vand.u32 %v248, 2147483648
    %v283 = vor.u32 1.1754944e-38, %v282
    %v284 = vsel %vm281, %v283, %v279
    %v285 = vmul.f32 %v270, %v284
    %v286 = vadd.f32 %v269, %v285
    %v287 = vadd.f32 %v244, %v245
    %v288 = vrcp.pop %v249
    %v289 = vmul.f32 %v249, %v288
    %v290 = vsub.f32 1.0, %v289
    %v291 = vmul.f32 %v288, %v290
    %v292 = vadd.f32 %v288, %v291
    %vm293 = vweird.f32 %v249
    %vm294 = vweird.f32 %v288
    %vm295 = vmor %vm293, %vm294
    %v296 = vsel %vm295, %v288, %v292
    %v297 = vand.u32 2147483647, %v249
    %vm298 = vcmp.eq.f32.partialorder %v297, 8.507059e+37
    %v299 = vand.u32 %v249, 2147483648
    %v300 = vor.u32 1.1754944e-38, %v299
    %v301 = vsel %vm298, %v300, %v296
    %v302 = vmul.f32 %v287, %v301
    %v303 = vadd.f32 %v286, %v302
    %v304 = vrcp.pop %v246
    %v305 = vmul.f32 %v246, %v304
    %v306 = vsub.f32 1.0, %v305
    %v307 = vmul.f32 %v304, %v306
    %v308 = vadd.f32 %v304, %v307
    %vm309 = vweird.f32 %v246
    %vm310 = vweird.f32 %v304
    %vm311 = vmor %vm309, %vm310
    %v312 = vsel %vm311, %v304, %v308
    %v313 = vand.u32 2147483647, %v246
    %vm314 = vcmp.eq.f32.partialorder %v313, 8.507059e+37
    %v315 = vand.u32 %v246, 2147483648
    %v316 = vor.u32 1.1754944e-38, %v315
    %v317 = vsel %vm314, %v316, %v312
    %v318 = vmul.f32 1.0, %v317
    %v319 = vmul.f32 %v318, %v318
    %v320 = vlog2.pop %v246
    %v321 = vmul.f32 %v320, 0.6931472
    %v322 = vsub.f32 %v246, 0.5
    %v323 = vmul.f32 %v322, %v321
    %v324 = vsub.f32 %v323, %v246
    %v325 = vadd.f32 %v324, 0.9189385
    %v326 = vmul.f32 %v319, -0.0005952381
    %v327 = vadd.f32 %v326, 0.0007936508
    %v328 = vmul.f32 %v319, %v327
    %v329 = vadd.f32 %v328, -0.0027777778
    %v330 = vmul.f32 %v319, %v329
    %v331 = vadd.f32 %v330, 0.083333336
    %v332 = vmul.f32 %v318, %v331
    %v333 = vadd.f32 %v325, %v332
    %v334 = vsub.f32 %v333, %v253
    %v335 = vmul.f32 %v318, 0.5
    %v336 = vsub.f32 %v321, %v335
    %v337 = vmul.f32 %v319, 0.003968254
    %v338 = vsub.f32 0.008333334, %v337
    %v339 = vmul.f32 %v319, %v338
    %v340 = vsub.f32 0.083333336, %v339
    %v341 = vmul.f32 %v319, %v340
    %v342 = vsub.f32 %v336, %v341
    %v343 = vsub.f32 %v342, %v303
    %v344 = vsub.f32 %v130, 1.0
    %v345 = vsub.f32 %v240, %v343
    %v346 = vmul.f32 %v344, %v345
    %v347 = vsub.f32 %v346, %v231
    %v348 = vsub.f32 %v334, 3.1780539
    %v349 = vsel %vm73, %v347, 0.0
    %v350 = vrot.slane %v349, 4
    %v351 = vadd.f32 %v349, %v350
    %v352 = vrot.slane %v351, 2
    %v353 = vadd.f32 %v351, %v352
    %v354 = vrot.slane %v353, 1
    %v355 = vadd.f32 %v353, %v354
    %v356 = vadd.f32 %v348, %v355
    %s357 = sld [smem:[#allocation2]]
    %v358 = vstv %s357
    %v359 = vmul.f32 %v358, %v356
    %v360 = vadd.f32 %v127, %v359
    %v361 = vmul.f32 %v360, %v66
    %vm362 = vcmask 1040384
    %v363 = vsel %vm362, %v361, 0.0
    %364 = vadd.xlane.f32.xlu0 %v363
    %v365 = vpop.xlane.xlu0 %364
    %v366 = vrot.slane %v365, 4
    %v367 = vadd.f32 %v365, %v366
    %v368 = vrot.slane %v367, 2
    %v369 = vadd.f32 %v367, %v368
    %v370 = vrot.slane %v369, 1
    %v371 = vadd.f32 %v369, %v370
    %s372 = vtos %v371
    %v373 = vstv %s372
    %vm374 = vcmask 0
    %375 = vst.msk [vmem:[#allocation9] sm:$0x1] %vm374, %v373
    %v376 = vsel %vm73, %v55, -inf
    %v377 = vrot.slane %v376, 4
    %v378 = vmax.f32 %v376, %v377
    %v379 = vrot.slane %v378, 2
    %v380 = vmax.f32 %v378, %v379
    %v381 = vrot.slane %v380, 1
    %v382 = vmax.f32 %v380, %v381
    %vm383 = vcmp.eq.f32.partialorder %v55, %v382
    %v384 = vcvt.s32.f32 %v68
    %v385 = vsel %vm383, %v384, 5.0
    %v386 = vsel %vm73, %v385, inf
    %v387 = vrot.slane %v386, 4
    %v388 = vmin.f32 %v386, %v387
    %v389 = vrot.slane %v388, 2
    %v390 = vmin.f32 %v388, %v389
    %v391 = vrot.slane %v390, 1
    %v392 = vmin.f32 %v390, %v391
    %v393 = vcvt.s32.f32 %v56
    %vm394 = vcmp.eq.f32.partialorder %v392, %v393
    %v395 = vsel %vm394, 1, 0
    %v396 = vcvt.s32.f32 %v395
    %v397 = vmul.f32 %v396, %v66
    %v398 = vsel %vm362, %v397, 0.0
    %399 = vadd.xlane.f32.xlu0 %v398
    %v400 = vpop.xlane.xlu0 %399
    %v401 = vrot.slane %v400, 4
    %v402 = vadd.f32 %v400, %v401
    %v403 = vrot.slane %v402, 2
    %v404 = vadd.f32 %v402, %v403
    %v405 = vrot.slane %v404, 1
    %v406 = vadd.f32 %v404, %v405
    %s407 = vtos %v406
    %v408 = vstv %s407
    %409 = vst.msk [vmem:[#allocation10] sm:$0x1] %vm374, %v408
    // Predicated region
    $region30: #{tpu_custom_call.1} parent=1 // pred_check
      _
    $region31: #{tpu_custom_call.1} parent=1 // pred_check_branch
      %411 = sbr.rel (0) target = $region33
    $region32: #{tpu_custom_call.1} parent=1 // pred_region
      %413 = vsyncadd [#allocation6], 0
      %s415 = sshll.u32 [#allocation9], 4
      %s416 = int_to_ptr.vmem [resolvable:$true] %s415
      %s417 = sshll.u32 %s5, 4
      %s418 = int_to_ptr.hbm [resolvable:$true] %s417
      %420 = dma.vmem_to_hbm [thread:$0]  %s416, 16, %s418, [#allocation6]
    $region33: #{tpu_custom_call.1} parent=1 // pred_fallthru
      _
    // Predicated region
    $region34: #{tpu_custom_call.1} parent=1 // pred_check
      _
    $region35: #{tpu_custom_call.1} parent=1 // pred_check_branch
      %422 = sbr.rel (0) target = $region37
    $region36: #{tpu_custom_call.1} parent=1 // pred_region
      %424 = vsyncadd [#allocation11], 0
      %s426 = sshll.u32 [#allocation10], 4
      %s427 = int_to_ptr.vmem [resolvable:$true] %s426
      %s428 = sshll.u32 %s6, 4
      %s429 = int_to_ptr.hbm [resolvable:$true] %s428
      %431 = dma.vmem_to_hbm [thread:$0]  %s427, 16, %s429, [#allocation11]
    $region37: #{tpu_custom_call.1} parent=1 // pred_fallthru
      _
    // Predicated region
    $region38: #{tpu_custom_call.1} parent=1 // pred_check
      _
    $region39: #{tpu_custom_call.1} parent=1 // pred_check_branch
      %433 = sbr.rel (0) target = $region41
    $region40: #{tpu_custom_call.1} parent=1 // pred_region
      %435 = dma.done [#allocation6], 16
    $region41: #{tpu_custom_call.1} parent=1 // pred_fallthru
      _
    // Predicated region
    $region42: #{tpu_custom_call.1} parent=1 // pred_check
      _
    $region43: #{tpu_custom_call.1} parent=1 // pred_check_branch
      %437 = sbr.rel (0) target = $region45
    $region44: #{tpu_custom_call.1} parent=1 // pred_region
      %439 = dma.done [#allocation11], 16
    $region45: #{tpu_custom_call.1} parent=1 // pred_fallthru
      _
    %440 = vsyncpa [#allocation5], 1
    %441 = vsyncpa [#allocation8], 1
    %442 = vsyncpa [#allocation6], 1
    %443 = vsyncpa [#allocation11], 1

</llo_original>
